<compile_context>
chip_gen: v7x
topology: tpu7x:2x2x1
jax: 0.10.0
libtpu: 0.0.40
codegen_flags: <defaults>
</compile_context>

<pallas_src>
import functools

import jax
import jax.numpy as jnp
from jax import lax
from jax.experimental import pallas as pl
from jax.experimental.pallas import tpu as pltpu


# ---------------------------------------------------------------------------
# Kernel: one (batch, H-tile) step of ConvTranspose2d(C, C, 4, stride 2, pad 1).
# Input tile is the haloed, zero-padded NHWC slab (1, TH+2, W+2, C) in bf16;
# output is the parity-grouped (1, TH*W, 4*C) bf16 tile, last dim = (r, s, co).
# ---------------------------------------------------------------------------
def _convt4x4s2_kernel(xt_ref, w_ref, b_ref, o_ref):
    TH = xt_ref.shape[1] - 2
    Wd = xt_ref.shape[2] - 2
    C = xt_ref.shape[3]
    xt = xt_ref[0]                                        # (TH+2, W+2, C) bf16

    # im2col slab (TH*W, 9C): column group (ph*3 + pw) is the patch shifted by
    # (ph, pw).  Single K = 9C contraction fills the MXU (K=288 at C=32) and
    # keeps all accumulation inside the MXU result path.
    cols = []
    for ph in range(3):
        for pw in range(3):
            cols.append(xt[ph:ph + TH, pw:pw + Wd, :].reshape(TH * Wd, C))
    slab = jnp.concatenate(cols, axis=1)                  # (TH*W, 9C)

    acc = jnp.dot(slab, w_ref[...], preferred_element_type=jnp.float32)
    o_ref[0] = (acc + b_ref[...]).astype(o_ref.dtype)     # bias in f32 epilogue


# ---------------------------------------------------------------------------
# Weight packing: PyTorch ConvTranspose2d weight (Cin, Cout, 4, 4) -> (9C, 4C)
# stencil matrix.  taps[(ph,pw,ci), (r,s,co)] = w[ci, co, 3+r-2ph, 3+s-2pw]
# where in range; each of the 16 original taps appears exactly once.
# ---------------------------------------------------------------------------
def _build_subpixel_taps(w):
    C = w.shape[0]
    taps = jnp.zeros((3, 3, C, 2, 2, C), w.dtype)
    for ph in range(3):
        for pw in range(3):
            for r in range(2):
                for s in range(2):
                    kh = 3 + r - 2 * ph
                    kw = 3 + s - 2 * pw
                    if 0 <= kh <= 3 and 0 <= kw <= 3:
                        taps = taps.at[ph, pw, :, r, s, :].set(w[:, :, kh, kw])
    return taps.reshape(9 * C, 4 * C)


def _pick_tile_rows(H, W, C, budget_bytes=2 << 20):
    """Largest divisor of H whose per-step input/output tiles fit the budget."""
    for cand in range(H, 0, -1):
        if H % cand:
            continue
        out_tile = cand * W * 4 * C * 2
        in_tile = (cand + 2) * (W + 2) * C * 2
        if out_tile <= budget_bytes and in_tile <= budget_bytes:
            return cand
    return 1


def conv_transpose_4x4_s2(x_nchw, w, b, *, th=None,
                          compute_dtype=jnp.bfloat16, out_dtype=jnp.bfloat16):
    """ConvTranspose2d(C, C, (4,4), stride (2,2), padding (1,1)); NCHW in/out.

    Precision choice (documented deviation from the f32 PyTorch reference):
    matmul operands and the returned tensor are bf16; accumulation is f32.
    """
    B, C, H, W = x_nchw.shape
    if th is None:
        th = _pick_tile_rows(H, W, C)
    assert H % th == 0, f"tile rows {th} must divide H={H}"
    n_tiles = H // th
    steps = B * n_tiles

    # Input prep (all on the small tensor, one fused XLA pass): NCHW -> NHWC,
    # 1-px zero pad, overlapping (2-row halo) row tiles, bf16 cast.
    x_nhwc = jnp.transpose(x_nchw, (0, 2, 3, 1))
    xp = jnp.pad(x_nhwc, ((0, 0), (1, 1), (1, 1), (0, 0)))
    rows = jnp.arange(n_tiles)[:, None] * th + jnp.arange(th + 2)[None, :]
    xt = xp[:, rows]                                      # (B, nT, th+2, W+2, C)
    xt = xt.reshape(steps, th + 2, W + 2, C).astype(compute_dtype)

    w_packed = _build_subpixel_taps(w).astype(compute_dtype)    # (9C, 4C)
    b4 = jnp.tile(b, 4).reshape(1, 4 * C).astype(jnp.float32)   # (1, 4C)

    # VMEM budget (double-buffered in/out tiles + weights + slab + accumulator).
    out_itemsize = jnp.dtype(out_dtype).itemsize
    in_tile_b = (th + 2) * (W + 2) * C * 2
    out_tile_b = th * W * 4 * C * out_itemsize
    w_b = w_packed.size * 2
    slab_b = th * W * 9 * C * 2
    acc_b = th * W * 4 * C * 4
    vmem_needed = 2 * (in_tile_b + out_tile_b) + 2 * (w_b + 4 * C * 4) + slab_b + acc_b
    vmem_limit = int(min(64 * 2**20, max(2 * vmem_needed, 16 * 2**20)))

    cost = pl.CostEstimate(
        flops=2 * steps * (th * W) * (9 * C) * (4 * C),
        transcendentals=0,
        bytes_accessed=(xt.size * 2 + w_packed.size * 2 + b4.size * 4
                        + steps * th * W * 4 * C * out_itemsize),
    )

    out = pl.pallas_call(
        _convt4x4s2_kernel,
        out_shape=jax.ShapeDtypeStruct((steps, th * W, 4 * C), out_dtype),
        grid=(steps,),
        in_specs=[
            pl.BlockSpec((1, th + 2, W + 2, C), lambda i: (i, 0, 0, 0)),
            pl.BlockSpec((9 * C, 4 * C), lambda i: (0, 0)),   # grid-invariant
            pl.BlockSpec((1, 4 * C), lambda i: (0, 0)),       # grid-invariant
        ],
        out_specs=pl.BlockSpec((1, th * W, 4 * C), lambda i: (i, 0, 0)),
        compiler_params=pltpu.CompilerParams(
            dimension_semantics=("parallel",),
            vmem_limit_bytes=vmem_limit),
        cost_estimate=cost,
    )(xt, w_packed, b4)

    # (steps, th*W, 4C) -> (B, nT, th, W, r, s, C): axes (b, t, h, w, r, s, c).
    # Single bf16 transpose to (b, c, t, h, r, w, s), then a free reshape gives
    # NCHW (B, C, 2H, 2W) since Y = (t*th + h)*2 + r and X = w*2 + s.
    out = out.reshape(B, n_tiles, th, W, 2, 2, C)
    out = jnp.transpose(out, (0, 6, 1, 2, 4, 3, 5))
    return out.reshape(B, C, 2 * H, 2 * W)


# ---------------------------------------------------------------------------
# Module forward: Upsample(x, t) ignores t (faithful to the reference).
# ---------------------------------------------------------------------------
def upsample_forward(x_nchw, t, params, *, th=None):
    _ = t
    return conv_transpose_4x4_s2(x_nchw, params["conv_w"], params["conv_b"], th=th)


# ---------------------------------------------------------------------------
# Pure-JAX reference (direct scatter definition of ConvTranspose2d) for the
# numerics check.  Operands are pre-quantized to bf16 to match kernel inputs.
# ---------------------------------------------------------------------------
def _ref_conv_transpose(x, w, b):
    B, C, H, W = x.shape
    out = jnp.zeros((B, C, 2 * H + 2, 2 * W + 2), jnp.float32)
    for kh in range(4):
        for kw in range(4):
            contrib = jnp.einsum("bihw,io->bohw", x, w[:, :, kh, kw],
                                 precision=lax.Precision.HIGHEST)
            out = out.at[:, :, kh:kh + 2 * H:2, kw:kw + 2 * W:2].add(contrib)
    return out[:, :, 1:1 + 2 * H, 1:1 + 2 * W] + b[None, :, None, None]


if __name__ == "__main__":
    key = jax.random.PRNGKey(0)
    kx, kw, kb = jax.random.split(key, 3)

    B, C, H, W = 2, 32, 16, 16
    x = jax.random.normal(kx, (B, C, H, W), jnp.float32)
    t = jnp.full((B,), 50, jnp.int32)                     # ignored by forward
    params = dict(
        conv_w=jax.random.normal(kw, (C, C, 4, 4), jnp.float32) * 0.1,
        conv_b=jax.random.normal(kb, (C,), jnp.float32) * 0.1,
    )

    # Reference with the same bf16 operand quantization the kernel uses.
    xq = x.astype(jnp.bfloat16).astype(jnp.float32)
    wq = params["conv_w"].astype(jnp.bfloat16).astype(jnp.float32)
    ref = _ref_conv_transpose(xq, wq, params["conv_b"])

    # Exercise both the multi-tile (H-tiled with halo) and whole-image paths.
    for tile_rows in (8, None):
        fwd = jax.jit(functools.partial(upsample_forward, th=tile_rows))
        out = fwd(x, t, params)
        jax.block_until_ready(out)
        assert out.shape == (B, C, 2 * H, 2 * W), out.shape
        assert out.dtype == jnp.bfloat16, out.dtype
        err = float(jnp.max(jnp.abs(out.astype(jnp.float32) - ref)
                            / (jnp.abs(ref) + 1.0)))
        assert err < 3e-2, f"th={tile_rows}: max rel err {err}"

    print("KERNEL_OK")
</pallas_src>

<mosaic_0001>
module attributes {stable_mosaic.version = 11 : i64} {
  func.func @_convt4x4s2_kernel(%arg0: i32, %arg1: memref<1x10x18x32xbf16, #tpu.memory_space<vmem>>, %arg2: memref<288x128xbf16, #tpu.memory_space<vmem>>, %arg3: memref<1x128xf32, #tpu.memory_space<vmem>>, %arg4: memref<1x128x128xbf16, #tpu.memory_space<vmem>>) attributes {dimension_semantics = [#tpu.dimension_semantics<parallel>], iteration_bounds = array<i64: 4>, scalar_prefetch = 0 : i64, scratch_operands = 0 : i64, tpu.core_type = #tpu.core_type<tc>, window_params = [{transform_indices = @transform_0, window_bounds = array<i64: 1, 10, 18, 32>}, {pipeline_mode = #tpu.pipeline_mode<synchronous>, transform_indices = @transform_1, window_bounds = array<i64: 288, 128>}, {pipeline_mode = #tpu.pipeline_mode<synchronous>, transform_indices = @transform_2, window_bounds = array<i64: 1, 128>}, {transform_indices = @transform_3, window_bounds = array<i64: 1, 128, 128>}]} {
    %c0 = arith.constant 0 : index
    %c0_0 = arith.constant 0 : index
    %c0_1 = arith.constant 0 : index
    %c0_2 = arith.constant 0 : index
    %0 = vector.load %arg1[%c0, %c0_0, %c0_1, %c0_2] : memref<1x10x18x32xbf16, #tpu.memory_space<vmem>>, vector<1x10x18x32xbf16>
    %1 = vector.shape_cast %0 : vector<1x10x18x32xbf16> to vector<10x18x32xbf16>
    %2 = vector.extract_strided_slice %1 {offsets = [0, 0, 0], sizes = [8, 16, 32], strides = [1, 1, 1]} : vector<10x18x32xbf16> to vector<8x16x32xbf16>
    %3 = vector.shape_cast %2 : vector<8x16x32xbf16> to vector<128x32xbf16>
    %4 = vector.extract_strided_slice %1 {offsets = [0, 1, 0], sizes = [8, 16, 32], strides = [1, 1, 1]} : vector<10x18x32xbf16> to vector<8x16x32xbf16>
    %5 = vector.shape_cast %4 : vector<8x16x32xbf16> to vector<128x32xbf16>
    %6 = vector.extract_strided_slice %1 {offsets = [0, 2, 0], sizes = [8, 16, 32], strides = [1, 1, 1]} : vector<10x18x32xbf16> to vector<8x16x32xbf16>
    %7 = vector.shape_cast %6 : vector<8x16x32xbf16> to vector<128x32xbf16>
    %8 = vector.extract_strided_slice %1 {offsets = [1, 0, 0], sizes = [8, 16, 32], strides = [1, 1, 1]} : vector<10x18x32xbf16> to vector<8x16x32xbf16>
    %9 = vector.shape_cast %8 : vector<8x16x32xbf16> to vector<128x32xbf16>
    %10 = vector.extract_strided_slice %1 {offsets = [1, 1, 0], sizes = [8, 16, 32], strides = [1, 1, 1]} : vector<10x18x32xbf16> to vector<8x16x32xbf16>
    %11 = vector.shape_cast %10 : vector<8x16x32xbf16> to vector<128x32xbf16>
    %12 = vector.extract_strided_slice %1 {offsets = [1, 2, 0], sizes = [8, 16, 32], strides = [1, 1, 1]} : vector<10x18x32xbf16> to vector<8x16x32xbf16>
    %13 = vector.shape_cast %12 : vector<8x16x32xbf16> to vector<128x32xbf16>
    %14 = vector.extract_strided_slice %1 {offsets = [2, 0, 0], sizes = [8, 16, 32], strides = [1, 1, 1]} : vector<10x18x32xbf16> to vector<8x16x32xbf16>
    %15 = vector.shape_cast %14 : vector<8x16x32xbf16> to vector<128x32xbf16>
    %16 = vector.extract_strided_slice %1 {offsets = [2, 1, 0], sizes = [8, 16, 32], strides = [1, 1, 1]} : vector<10x18x32xbf16> to vector<8x16x32xbf16>
    %17 = vector.shape_cast %16 : vector<8x16x32xbf16> to vector<128x32xbf16>
    %18 = vector.extract_strided_slice %1 {offsets = [2, 2, 0], sizes = [8, 16, 32], strides = [1, 1, 1]} : vector<10x18x32xbf16> to vector<8x16x32xbf16>
    %19 = vector.shape_cast %18 : vector<8x16x32xbf16> to vector<128x32xbf16>
    %20 = tpu.concatenate %3, %5, %7, %9, %11, %13, %15, %17, %19 in 1 : vector<128x32xbf16>, vector<128x32xbf16>, vector<128x32xbf16>, vector<128x32xbf16>, vector<128x32xbf16>, vector<128x32xbf16>, vector<128x32xbf16>, vector<128x32xbf16>, vector<128x32xbf16> -> vector<128x288xbf16>
    %c0_3 = arith.constant 0 : index
    %c0_4 = arith.constant 0 : index
    %21 = vector.load %arg2[%c0_3, %c0_4] : memref<288x128xbf16, #tpu.memory_space<vmem>>, vector<288x128xbf16>
    %cst = arith.constant dense<0.000000e+00> : vector<128x128xf32>
    %22 = tpu.matmul %20, %21, %cst {dimension_numbers = #tpu.dot_dimension_numbers<[1], [0], [0], [1], [0, 0, 1, 1], [], []>} : vector<128x288xbf16>, vector<288x128xbf16>, vector<128x128xf32> -> vector<128x128xf32>
    %c0_5 = arith.constant 0 : index
    %c0_6 = arith.constant 0 : index
    %23 = vector.load %arg3[%c0_5, %c0_6] : memref<1x128xf32, #tpu.memory_space<vmem>>, vector<1x128xf32>
    %24 = vector.broadcast %23 : vector<1x128xf32> to vector<128x128xf32>
    %25 = arith.addf %22, %24 : vector<128x128xf32>
    %26 = arith.truncf %25 : vector<128x128xf32> to vector<128x128xbf16>
    %c0_7 = arith.constant 0 : index
    %c0_8 = arith.constant 0 : index
    %c0_9 = arith.constant 0 : index
    %27 = vector.load %arg4[%c0_7, %c0_8, %c0_9] : memref<1x128x128xbf16, #tpu.memory_space<vmem>>, vector<1x128x128xbf16>
    %28 = vector.shape_cast %27 : vector<1x128x128xbf16> to vector<128x128xbf16>
    %29 = vector.shape_cast %26 : vector<128x128xbf16> to vector<1x128x128xbf16>
    tpu.vector_store %arg4[%c0_7, %c0_8, %c0_9], %29 {strides = array<i32>} : memref<1x128x128xbf16, #tpu.memory_space<vmem>>, vector<1x128x128xbf16>,
    return
  }
  func.func @transform_0(%arg0: i32) -> (i32, i32, i32, i32) {
    %c0_i32 = arith.constant 0 : i32
    %c0_i32_0 = arith.constant 0 : i32
    %c0_i32_1 = arith.constant 0 : i32
    %c0_i32_2 = arith.constant 0 : i32
    return %arg0, %c0_i32, %c0_i32_0, %c0_i32_1 : i32, i32, i32, i32
  }
  func.func @transform_1(%arg0: i32) -> (i32, i32) {
    %c0_i32 = arith.constant 0 : i32
    %c0_i32_0 = arith.constant 0 : i32
    %c0_i32_1 = arith.constant 0 : i32
    return %c0_i32, %c0_i32_0 : i32, i32
  }
  func.func @transform_2(%arg0: i32) -> (i32, i32) {
    %c0_i32 = arith.constant 0 : i32
    %c0_i32_0 = arith.constant 0 : i32
    %c0_i32_1 = arith.constant 0 : i32
    return %c0_i32, %c0_i32_0 : i32, i32
  }
  func.func @transform_3(%arg0: i32) -> (i32, i32, i32) {
    %c0_i32 = arith.constant 0 : i32
    %c0_i32_0 = arith.constant 0 : i32
    %c0_i32_1 = arith.constant 0 : i32
    return %arg0, %c0_i32, %c0_i32_0 : i32, i32, i32
  }
}

</mosaic_0001>

<llo_original>
// kernel: tile.8
$region0: #{tile.8}
  #allocation0 [shape = 's32[1]{0}', space=sflag, size = 0x4, scoped, tag = 'scoped memory for tile.8']
  %s0 = inlined_call_operand.vmem [shape: f32[32], index: 0, kind: input, shape index: {}]
  %s1 = inlined_call_operand.vmem [shape: f32[4,32], index: 1, kind: output, shape index: {}]
  // Predicated region
  $region2: #{tile.8} parent=0 // pred_check
    _
  $region3: #{tile.8} parent=0 // pred_check_branch
    %3 = sbr.rel (0) target = $region5
  $region4: #{tile.8} parent=0 // pred_region
    _
  $region5: #{tile.8} parent=0 // pred_fallthru
    _
  %v4 = vld [vmem:[%s0] ss:$0 sm:$0xff]
  %5 = vst [vmem:[%s1] sm:$0xf] %v4

// kernel: tile.9
$region0: #{tile.9}
  %s0 = inlined_call_operand.vmem [shape: f32[4,32], index: 0, kind: input, shape index: {}]
  %s1 = inlined_call_operand.vmem [shape: f32[1,128], index: 1, kind: output, shape index: {}]
  $region1: #{tile.9} parent=0
    #allocation0 [shape = 'u8[4096]{0}', space=vmem, size = 0x1000, scoped, tag = 'scoped mem for output reshape']
    #allocation1 [shape = 'u8[4096]{0}', space=vmem, size = 0x1000, scoped, tag = 'scoped mem for input reshape']
    %s3 = sshllo.u32 0, 4
    %v4 = vld [vmem:[%s0] sm:%s3]
    %5 = vst [vmem:[#allocation1] sm:%s3] %v4
    %v6 = vld [vmem:[#allocation1] sm:$0x1]
    %vm7 = vcmask 261120
    %8 = vst.msk [vmem:[#allocation0] sm:$0x1] %vm7, %v6
    %s9 = scalar_lea.vmem [#allocation1], 3
    %v10 = vld [vmem:[%s9] sm:$0x1]
    %11 = vrot.lane.b32.xlu0 %v10, 96
    %v12 = vpop.permute.xlu0 %11
    %vm13 = vcmask 1048320
    %14 = vst.msk [vmem:[#allocation0] sm:$0x1] %vm13, %v12
    %s15 = scalar_lea.vmem [#allocation1], 2
    %v16 = vld [vmem:[%s15] sm:$0x1]
    %17 = vrot.lane.b32.xlu0 %v16, 64
    %v18 = vpop.permute.xlu0 %17
    %vm19 = vcmask 785920
    %20 = vst.msk [vmem:[#allocation0] sm:$0x1] %vm19, %v18
    %s21 = scalar_lea.vmem [#allocation1], 1
    %v22 = vld [vmem:[%s21] sm:$0x1]
    %23 = vrot.lane.b32.xlu0 %v22, 32
    %v24 = vpop.permute.xlu0 %23
    %vm25 = vcmask 523520
    %26 = vst.msk [vmem:[#allocation0] sm:$0x1] %vm25, %v24
    %s28 = sshllo.u32 0, 1
    %v30 = vld [vmem:[#allocation0] sm:%s28]
    %s31 = sshllo.u32 0, 1
    %32 = vst [vmem:[%s1] sm:%s31] %v30

// kernel: upsample_forward.1
$region0: #{upsample_forward.1}
  #allocation0 [shape = 'u32[]', space=smem, size = 0x4, offset = 0x4, fixed_abs, tag = 'smem constant byte address 0x4 - core index']
  #allocation1 [shape = 'u32[144,128]{1,0:T(1,128)}', space=vmem, size = 0x12000, scoped, tag = 'internal scratch']
  %s0 = inlined_call_operand.vmem [shape: bf16[4,10,18,32], index: 0, kind: input, shape index: {}]
  %s1 = inlined_call_operand.vmem [shape: bf16[288,128], index: 1, kind: input, shape index: {}]
  %s2 = inlined_call_operand.vmem [shape: f32[1,128], index: 2, kind: input, shape index: {}]
  %s3 = inlined_call_operand.vmem [shape: bf16[4,128,128], index: 3, kind: output, shape index: {}]
  %s4 = sld [smem:[#allocation0]]
  $region45: #{upsample_forward.1} parent=0
    _
  %s6 = ssub.s32 1, %s4
  %s7 = scalar_select 0, %s6, %s4
  loop: start=0, step=1, limit=6
  $region2: #{upsample_forward.1} parent=0 // loop_pre_header
    _
  $region3: #{upsample_forward.1} parent=0 // loop_header
    %s9 = sphi 0, %s13
    %p10 = scmp.ge.s32.totalorder %s9, 6
    %s19 = sphi 0, %s21
    %s22 = sphi 0, %s19
    %s23 = sphi 0, %s22
    %s39 = sphi 0, %s23
    %s43 = sphi 0, %s43
    %s45 = sphi 0, %s43
    %s46 = sphi 0, %s45
    %s60 = sphi 0, %s46
    %s64 = sphi 0, %s64
    %s66 = sphi 0, %s64
    %s67 = sphi 0, %s66
    %s81 = sphi 0, %s67
    %s87 = sphi 0, %s89
    %s90 = sphi 0, %s87
    %s91 = sphi 0, %s90
    %s107 = sphi 0, %s91
  $region4: #{upsample_forward.1} parent=0 // loop_header_branch
    %12 = sbr.rel (%p10) target = $region8
  $region5: #{upsample_forward.1} parent=0 // loop_body
    %s14 = ssub.s32 %s9, 1
    %s15 = ssub.s32 %s9, 2
    %s16 = sadd.s32 %s9, 1
    %s17 = ssub.s32 %s9, %s16
    %p18 = scmp.eq.s32.totalorder %s17, 0
    %s20 = sadd.s32 %s19, 1
    %s21 = scalar_select %p18, %s19, %s20
    %p24 = pneg %p18
    %p25 = scmp.eq.s32.totalorder %s9, 3
    %p26 = por %p24, %p25
    %p27 = scmp.ne.s32.totalorder %s19, %s22
    %p28 = scmp.eq.s32.totalorder %s9, 0
    %p29 = por %p27, %p28
    %p30 = scmp.ne.s32.totalorder %s19, %s22
    %p31 = scmp.eq.s32.totalorder %s14, 3
    %p32 = por %p30, %p31
    %p33 = scmp.ne.s32.totalorder %s22, %s23
    %p34 = scmp.eq.s32.totalorder %s14, 0
    %p35 = por %p33, %p34
    %p36 = scmp.ne.s32.totalorder %s22, %s23
    %p37 = scmp.eq.s32.totalorder %s15, 3
    %p38 = por %p36, %p37
    %p40 = scmp.ne.s32.totalorder %s23, %s39
    %p41 = scmp.eq.s32.totalorder %s15, 0
    %p42 = por %p40, %p41
    %s44 = sadd.s32 %s43, 1
    %p47 = scmp.eq.s32.totalorder %s9, 3
    %p48 = scmp.ne.s32.totalorder %s43, %s45
    %p49 = scmp.eq.s32.totalorder %s9, 0
    %p50 = por %p48, %p49
    %p51 = scmp.ne.s32.totalorder %s43, %s45
    %p52 = scmp.eq.s32.totalorder %s14, 3
    %p53 = por %p51, %p52
    %p54 = scmp.ne.s32.totalorder %s45, %s46
    %p55 = scmp.eq.s32.totalorder %s14, 0
    %p56 = por %p54, %p55
    %p57 = scmp.ne.s32.totalorder %s45, %s46
    %p58 = scmp.eq.s32.totalorder %s15, 3
    %p59 = por %p57, %p58
    %p61 = scmp.ne.s32.totalorder %s46, %s60
    %p62 = scmp.eq.s32.totalorder %s15, 0
    %p63 = por %p61, %p62
    %s65 = sadd.s32 %s64, 1
    %p68 = scmp.eq.s32.totalorder %s9, 3
    %p69 = scmp.ne.s32.totalorder %s64, %s66
    %p70 = scmp.eq.s32.totalorder %s9, 0
    %p71 = por %p69, %p70
    %p72 = scmp.ne.s32.totalorder %s64, %s66
    %p73 = scmp.eq.s32.totalorder %s14, 3
    %p74 = por %p72, %p73
    %p75 = scmp.ne.s32.totalorder %s66, %s67
    %p76 = scmp.eq.s32.totalorder %s14, 0
    %p77 = por %p75, %p76
    %p78 = scmp.ne.s32.totalorder %s66, %s67
    %p79 = scmp.eq.s32.totalorder %s15, 3
    %p80 = por %p78, %p79
    %p82 = scmp.ne.s32.totalorder %s67, %s81
    %p83 = scmp.eq.s32.totalorder %s15, 0
    %p84 = por %p82, %p83
    %s85 = ssub.s32 %s9, %s16
    %p86 = scmp.eq.s32.totalorder %s85, 0
    %s88 = sadd.s32 %s87, 1
    %s89 = scalar_select %p86, %s87, %s88
    %p92 = pneg %p86
    %p93 = scmp.eq.s32.totalorder %s9, 3
    %p94 = por %p92, %p93
    %p95 = scmp.ne.s32.totalorder %s87, %s90
    %p96 = scmp.eq.s32.totalorder %s9, 0
    %p97 = por %p95, %p96
    %p98 = scmp.ne.s32.totalorder %s87, %s90
    %p99 = scmp.eq.s32.totalorder %s14, 3
    %p100 = por %p98, %p99
    %p101 = scmp.ne.s32.totalorder %s90, %s91
    %p102 = scmp.eq.s32.totalorder %s14, 0
    %p103 = por %p101, %p102
    %p104 = scmp.ne.s32.totalorder %s90, %s91
    %p105 = scmp.eq.s32.totalorder %s15, 3
    %p106 = por %p104, %p105
    %p108 = scmp.ne.s32.totalorder %s91, %s107
    %p109 = scmp.eq.s32.totalorder %s15, 0
    %p110 = por %p108, %p109
    %p111 = scmp.le.s32.totalorder 1, %s9
    %p112 = scmp.lt.s32.totalorder %s9, 5
    %p113 = pnand %p111, %p112
    %p114 = pneg %p113
    // Predicated region
    $region9: #{upsample_forward.1} parent=5 // pred_check
      _
    $region10: #{upsample_forward.1} parent=5 // pred_check_branch
      %116 = sbr.rel (%p113) target = $region12
    $region11: #{upsample_forward.1} parent=5 // pred_region
      %s117 = ssub.s32 %s9, 1
      // Predicated region
      $region13: #{upsample_forward.1} parent=11 // pred_check
        %p118 = pneg %p56
      $region14: #{upsample_forward.1} parent=11 // pred_check_branch
        %120 = sbr.rel (%p118) target = $region16
      $region15: #{upsample_forward.1} parent=11 // pred_region
        _
      $region16: #{upsample_forward.1} parent=11 // pred_fallthru
        _
      // Predicated region
      $region17: #{upsample_forward.1} parent=11 // pred_check
        %p121 = pneg %p77
      $region18: #{upsample_forward.1} parent=11 // pred_check_branch
        %123 = sbr.rel (%p121) target = $region20
      $region19: #{upsample_forward.1} parent=11 // pred_region
        _
      $region20: #{upsample_forward.1} parent=11 // pred_fallthru
        _
    $region12: #{upsample_forward.1} parent=5 // pred_fallthru
      _
    %p124 = scmp.lt.s32.totalorder %s9, 4
    // Predicated region
    $region21: #{upsample_forward.1} parent=5 // pred_check
      %p125 = pneg %p124
    $region22: #{upsample_forward.1} parent=5 // pred_check_branch
      %127 = sbr.rel (%p125) target = $region24
    $region23: #{upsample_forward.1} parent=5 // pred_region
      // Predicated region
      $region25: #{upsample_forward.1} parent=23 // pred_check
        %p128 = pneg %p29
      $region26: #{upsample_forward.1} parent=23 // pred_check_branch
        %130 = sbr.rel (%p128) target = $region28
      $region27: #{upsample_forward.1} parent=23 // pred_region
        %p131 = scmp.lt.s32.totalorder %s9, 3
        %s132 = scalar_select %p131, %s9, 3
        %s133 = smul.addr %s132, 30
        %s134 = smul.addr %s133, 4
        %s135 = scalar_lea.vmem %s0, %s134
      $region28: #{upsample_forward.1} parent=23 // pred_fallthru
        _
    $region24: #{upsample_forward.1} parent=5 // pred_fallthru
      _
    %p136 = scmp.le.s32.totalorder 1, %s9
    %p137 = scmp.lt.s32.totalorder %s9, 5
    %p138 = pnand %p136, %p137
    %p139 = pneg %p138
    // Predicated region
    $region29: #{upsample_forward.1} parent=5 // pred_check
      _
    $region30: #{upsample_forward.1} parent=5 // pred_check_branch
      %141 = sbr.rel (%p138) target = $region32
    $region31: #{upsample_forward.1} parent=5 // pred_region
      %s142 = ssub.s32 %s9, 1
      %p143 = scmp.lt.s32.totalorder %s14, 3
      %s144 = scalar_select %p143, %s14, 3
      %s145 = smul.addr %s144, 30
      %s146 = smul.addr %s145, 4
      %s147 = scalar_lea.vmem %s0, %s146
      %p148 = pneg %p35
      %p149 = pneg %p32
      %p150 = pneg %p56
      %p151 = pneg %p53
      %p152 = pneg %p77
      %p153 = pneg %p74
      %p154 = pneg %p103
      %p155 = pneg %p100
      %p156 = scmp.lt.s32.totalorder %s14, 3
      %s157 = scalar_select %p156, %s14, 3
      %s158 = smul.addr %s157, 16
      %s159 = smul.addr %s158, 4
      %s160 = scalar_lea.vmem %s3, %s159
      %p161 = scmp.lt.s32.totalorder %s14, 3
      %s162 = scalar_select %p161, %s14, 3
      %s163 = smul.addr %s162, 30
      %s164 = smul.addr %s163, 4
      %s165 = scalar_lea.vmem %s0, %s164
      %p166 = scmp.lt.s32.totalorder %s14, 3
      %s167 = scalar_select %p166, %s14, 3
      %s168 = smul.addr %s167, 16
      %s169 = smul.addr %s168, 4
      %s170 = scalar_lea.vmem %s3, %s169
      %v172 = vld [vmem:[%s165] sm:$0xf]
      %v173 = vld [vmem:[%s165 + $0x4] sm:$0xf]
      %v174 = vld [vmem:[%s165 + $0x8] sm:$0x1]
      %v175 = vld [vmem:[%s165 + $0xc] sm:$0xf]
      %v176 = vld [vmem:[%s165 + $0x10] sm:$0xf]
      %v177 = vld [vmem:[%s165 + $0x14] sm:$0x1]
      %v178 = vld [vmem:[%s165 + $0x18] sm:$0xf]
      %v179 = vld [vmem:[%s165 + $0x1c] sm:$0xf]
      %v180 = vld [vmem:[%s165 + $0x20] sm:$0x1]
      %v181 = vld [vmem:[%s165 + $0x24] sm:$0xf]
      %v182 = vld [vmem:[%s165 + $0x28] sm:$0xf]
      %v183 = vld [vmem:[%s165 + $0x2c] sm:$0x1]
      %v184 = vld [vmem:[%s165 + $0x30] sm:$0xf]
      %v185 = vld [vmem:[%s165 + $0x34] sm:$0xf]
      %v186 = vld [vmem:[%s165 + $0x38] sm:$0x1]
      %v187 = vld [vmem:[%s165 + $0x3c] sm:$0xf]
      %v188 = vld [vmem:[%s165 + $0x40] sm:$0xf]
      %v189 = vld [vmem:[%s165 + $0x44] sm:$0x1]
      %v190 = vld [vmem:[%s165 + $0x48] sm:$0xf]
      %v191 = vld [vmem:[%s165 + $0x4c] sm:$0xf]
      %v192 = vld [vmem:[%s165 + $0x50] sm:$0x1]
      %v193 = vld [vmem:[%s165 + $0x54] sm:$0xf]
      %v194 = vld [vmem:[%s165 + $0x58] sm:$0xf]
      %v195 = vld [vmem:[%s165 + $0x5c] sm:$0x1]
      %v196 = vld [vmem:[%s165 + $0x60] sm:$0xf]
      %v197 = vld [vmem:[%s165 + $0x64] sm:$0xf]
      %v198 = vld [vmem:[%s165 + $0x68] sm:$0x1]
      %v199 = vld [vmem:[%s165 + $0x6c] sm:$0xf]
      %v200 = vld [vmem:[%s165 + $0x70] sm:$0xf]
      %v201 = vld [vmem:[%s165 + $0x74] sm:$0x1]
      %vm202 = vsmask.f32 3328
      %vm203 = vsmask.f32 7440
      %vm204 = vmor %vm202, %vm203
      %v206 = vshrl.u32 %v172, 16
      %v208 = vrot.slane %v206, 4
      %v209 = vshll.u32 %v172, 16
      %v211 = vrot.slane %v209, 5
      %v212 = vor.u32 %v208, %v211
      %v213 = vrot.slane %v212, 4
      %v215 = vshll.u32 %v173, 16
      %v217 = vrot.slane %v215, 5
      %v218 = vsel %vm204, %v213, %v217
      %v219 = vshrl.u32 %v173, 16
      %v221 = vrot.slane %v219, 4
      %v222 = vor.u32 %v221, %v217
      %v223 = vrot.slane %v222, 4
      %v225 = vshll.u32 %v174, 16
      %v227 = vrot.slane %v225, 5
      %v228 = vsel %vm204, %v223, %v227
      %v230 = vshrl.u32 %v175, 16
      %v232 = vrot.slane %v230, 4
      %v233 = vshll.u32 %v175, 16
      %v235 = vrot.slane %v233, 5
      %v236 = vor.u32 %v232, %v235
      %v237 = vrot.slane %v236, 4
      %v239 = vshll.u32 %v176, 16
      %v241 = vrot.slane %v239, 5
      %v242 = vsel %vm204, %v237, %v241
      %v243 = vshrl.u32 %v176, 16
      %v245 = vrot.slane %v243, 4
      %v246 = vor.u32 %v245, %v241
      %v247 = vrot.slane %v246, 4
      %v249 = vshll.u32 %v177, 16
      %v251 = vrot.slane %v249, 5
      %v252 = vsel %vm204, %v247, %v251
      %v254 = vshrl.u32 %v178, 16
      %v256 = vrot.slane %v254, 4
      %v257 = vshll.u32 %v178, 16
      %v259 = vrot.slane %v257, 5
      %v260 = vor.u32 %v256, %v259
      %v261 = vrot.slane %v260, 4
      %v263 = vshll.u32 %v179, 16
      %v265 = vrot.slane %v263, 5
      %v266 = vsel %vm204, %v261, %v265
      %v267 = vshrl.u32 %v179, 16
      %v269 = vrot.slane %v267, 4
      %v270 = vor.u32 %v269, %v265
      %v271 = vrot.slane %v270, 4
      %v273 = vshll.u32 %v180, 16
      %v275 = vrot.slane %v273, 5
      %v276 = vsel %vm204, %v271, %v275
      %v278 = vshrl.u32 %v181, 16
      %v280 = vrot.slane %v278, 4
      %v281 = vshll.u32 %v181, 16
      %v283 = vrot.slane %v281, 5
      %v284 = vor.u32 %v280, %v283
      %v285 = vrot.slane %v284, 4
      %v287 = vshll.u32 %v182, 16
      %v289 = vrot.slane %v287, 5
      %v290 = vsel %vm204, %v285, %v289
      %v291 = vshrl.u32 %v182, 16
      %v293 = vrot.slane %v291, 4
      %v294 = vor.u32 %v293, %v289
      %v295 = vrot.slane %v294, 4
      %v297 = vshll.u32 %v183, 16
      %v299 = vrot.slane %v297, 5
      %v300 = vsel %vm204, %v295, %v299
      %v302 = vshrl.u32 %v184, 16
      %v304 = vrot.slane %v302, 4
      %v305 = vshll.u32 %v184, 16
      %v307 = vrot.slane %v305, 5
      %v308 = vor.u32 %v304, %v307
      %v309 = vrot.slane %v308, 4
      %v311 = vshll.u32 %v185, 16
      %v313 = vrot.slane %v311, 5
      %v314 = vsel %vm204, %v309, %v313
      %v315 = vshrl.u32 %v185, 16
      %v317 = vrot.slane %v315, 4
      %v318 = vor.u32 %v317, %v313
      %v319 = vrot.slane %v318, 4
      %v321 = vshll.u32 %v186, 16
      %v323 = vrot.slane %v321, 5
      %v324 = vsel %vm204, %v319, %v323
      %v326 = vshrl.u32 %v187, 16
      %v328 = vrot.slane %v326, 4
      %v329 = vshll.u32 %v187, 16
      %v331 = vrot.slane %v329, 5
      %v332 = vor.u32 %v328, %v331
      %v333 = vrot.slane %v332, 4
      %v335 = vshll.u32 %v188, 16
      %v337 = vrot.slane %v335, 5
      %v338 = vsel %vm204, %v333, %v337
      %v339 = vshrl.u32 %v188, 16
      %v341 = vrot.slane %v339, 4
      %v342 = vor.u32 %v341, %v337
      %v343 = vrot.slane %v342, 4
      %v345 = vshll.u32 %v189, 16
      %v347 = vrot.slane %v345, 5
      %v348 = vsel %vm204, %v343, %v347
      %v350 = vshrl.u32 %v190, 16
      %v352 = vrot.slane %v350, 4
      %v353 = vshll.u32 %v190, 16
      %v355 = vrot.slane %v353, 5
      %v356 = vor.u32 %v352, %v355
      %v357 = vrot.slane %v356, 4
      %v359 = vshll.u32 %v191, 16
      %v361 = vrot.slane %v359, 5
      %v362 = vsel %vm204, %v357, %v361
      %v363 = vshrl.u32 %v191, 16
      %v365 = vrot.slane %v363, 4
      %v366 = vor.u32 %v365, %v361
      %v367 = vrot.slane %v366, 4
      %v369 = vshll.u32 %v192, 16
      %v371 = vrot.slane %v369, 5
      %v372 = vsel %vm204, %v367, %v371
      %v374 = vshrl.u32 %v193, 16
      %v376 = vrot.slane %v374, 4
      %v377 = vshll.u32 %v193, 16
      %v379 = vrot.slane %v377, 5
      %v380 = vor.u32 %v376, %v379
      %v381 = vrot.slane %v380, 4
      %v383 = vshll.u32 %v194, 16
      %v385 = vrot.slane %v383, 5
      %v386 = vsel %vm204, %v381, %v385
      %v387 = vshrl.u32 %v194, 16
      %v389 = vrot.slane %v387, 4
      %v390 = vor.u32 %v389, %v385
      %v391 = vrot.slane %v390, 4
      %v393 = vshll.u32 %v195, 16
      %v395 = vrot.slane %v393, 5
      %v396 = vsel %vm204, %v391, %v395
      %vm421 = vcmask 1042432
      %vm422 = vcmask 1046532
      %vm423 = vmor %vm421, %vm422
      %v424 = vrot.slane %v172, 5
      %v425 = vrot.slane %v424, 4
      %v426 = vrot.slane %v173, 5
      %v427 = vsel %vm423, %v425, %v426
      %v428 = vrot.slane %v426, 4
      %v429 = vrot.slane %v174, 5
      %v430 = vsel %vm423, %v428, %v429
      %v431 = vrot.slane %v175, 5
      %v432 = vrot.slane %v431, 4
      %v433 = vrot.slane %v176, 5
      %v434 = vsel %vm423, %v432, %v433
      %v435 = vrot.slane %v433, 4
      %v436 = vrot.slane %v177, 5
      %v437 = vsel %vm423, %v435, %v436
      %v438 = vrot.slane %v178, 5
      %v439 = vrot.slane %v438, 4
      %v440 = vrot.slane %v179, 5
      %v441 = vsel %vm423, %v439, %v440
      %v442 = vrot.slane %v440, 4
      %v443 = vrot.slane %v180, 5
      %v444 = vsel %vm423, %v442, %v443
      %v445 = vrot.slane %v181, 5
      %v446 = vrot.slane %v445, 4
      %v447 = vrot.slane %v182, 5
      %v448 = vsel %vm423, %v446, %v447
      %v449 = vrot.slane %v447, 4
      %v450 = vrot.slane %v183, 5
      %v451 = vsel %vm423, %v449, %v450
      %v452 = vrot.slane %v184, 5
      %v453 = vrot.slane %v452, 4
      %v454 = vrot.slane %v185, 5
      %v455 = vsel %vm423, %v453, %v454
      %v456 = vrot.slane %v454, 4
      %v457 = vrot.slane %v186, 5
      %v458 = vsel %vm423, %v456, %v457
      %v459 = vrot.slane %v187, 5
      %v460 = vrot.slane %v459, 4
      %v461 = vrot.slane %v188, 5
      %v462 = vsel %vm423, %v460, %v461
      %v463 = vrot.slane %v461, 4
      %v464 = vrot.slane %v189, 5
      %v465 = vsel %vm423, %v463, %v464
      %v466 = vrot.slane %v190, 5
      %v467 = vrot.slane %v466, 4
      %v468 = vrot.slane %v191, 5
      %v469 = vsel %vm423, %v467, %v468
      %v470 = vrot.slane %v468, 4
      %v471 = vrot.slane %v192, 5
      %v472 = vsel %vm423, %v470, %v471
      %v473 = vrot.slane %v193, 5
      %v474 = vrot.slane %v473, 4
      %v475 = vrot.slane %v194, 5
      %v476 = vsel %vm423, %v474, %v475
      %v477 = vrot.slane %v475, 4
      %v478 = vrot.slane %v195, 5
      %v479 = vsel %vm423, %v477, %v478
      %v481 = vshrl.u32 %v196, 16
      %v483 = vrot.slane %v481, 4
      %v484 = vshll.u32 %v196, 16
      %v486 = vrot.slane %v484, 5
      %v487 = vor.u32 %v483, %v486
      %v488 = vrot.slane %v487, 4
      %v490 = vshll.u32 %v197, 16
      %v492 = vrot.slane %v490, 5
      %v493 = vsel %vm204, %v488, %v492
      %v494 = vshrl.u32 %v197, 16
      %v496 = vrot.slane %v494, 4
      %v497 = vor.u32 %v496, %v492
      %v498 = vrot.slane %v497, 4
      %v500 = vshll.u32 %v198, 16
      %v502 = vrot.slane %v500, 5
      %v503 = vsel %vm204, %v498, %v502
      %v507 = vrot.slane %v196, 5
      %v508 = vrot.slane %v507, 4
      %v509 = vrot.slane %v197, 5
      %v510 = vsel %vm423, %v508, %v509
      %v511 = vrot.slane %v509, 4
      %v512 = vrot.slane %v198, 5
      %v513 = vsel %vm423, %v511, %v512
      %v515 = vshrl.u32 %v199, 16
      %v517 = vrot.slane %v515, 4
      %v518 = vshll.u32 %v199, 16
      %v520 = vrot.slane %v518, 5
      %v521 = vor.u32 %v517, %v520
      %v522 = vrot.slane %v521, 4
      %v524 = vshll.u32 %v200, 16
      %v526 = vrot.slane %v524, 5
      %v527 = vsel %vm204, %v522, %v526
      %v528 = vshrl.u32 %v200, 16
      %v530 = vrot.slane %v528, 4
      %v531 = vor.u32 %v530, %v526
      %v532 = vrot.slane %v531, 4
      %v534 = vshll.u32 %v201, 16
      %v536 = vrot.slane %v534, 5
      %v537 = vsel %vm204, %v532, %v536
      %v541 = vrot.slane %v199, 5
      %v542 = vrot.slane %v541, 4
      %v543 = vrot.slane %v200, 5
      %v544 = vsel %vm423, %v542, %v543
      %v545 = vrot.slane %v543, 4
      %v546 = vrot.slane %v201, 5
      %v547 = vsel %vm423, %v545, %v546
      %v548 = vunpack.c.l.b16 %v172
      %v549 = vunpack.c.l.b16 %v173
      %v550 = vunpack.c.l.b16 %v175
      %v551 = vunpack.c.l.b16 %v176
      %v552 = vunpack.c.l.b16 %v178
      %v553 = vunpack.c.l.b16 %v179
      %v554 = vunpack.c.l.b16 %v181
      %v555 = vunpack.c.l.b16 %v182
      %v556 = vunpack.c.l.b16 %v184
      %v557 = vunpack.c.l.b16 %v185
      %v558 = vunpack.c.l.b16 %v187
      %v559 = vunpack.c.l.b16 %v188
      %v560 = vunpack.c.l.b16 %v190
      %v561 = vunpack.c.l.b16 %v191
      %v562 = vunpack.c.l.b16 %v193
      %v563 = vunpack.c.l.b16 %v194
      %v564 = vpack.c.b16 %v549, %v548
      %v565 = vpack.c.b16 %v551, %v550
      %v566 = vpack.c.b16 %v553, %v552
      %v567 = vpack.c.b16 %v555, %v554
      %v568 = vpack.c.b16 %v557, %v556
      %v569 = vpack.c.b16 %v559, %v558
      %v570 = vpack.c.b16 %v561, %v560
      %v571 = vpack.c.b16 %v563, %v562
      %v572 = vunpack.c.l.b16 %v218
      %v573 = vunpack.c.l.b16 %v228
      %v574 = vunpack.c.l.b16 %v242
      %v575 = vunpack.c.l.b16 %v252
      %v576 = vunpack.c.l.b16 %v266
      %v577 = vunpack.c.l.b16 %v276
      %v578 = vunpack.c.l.b16 %v290
      %v579 = vunpack.c.l.b16 %v300
      %v580 = vunpack.c.l.b16 %v314
      %v581 = vunpack.c.l.b16 %v324
      %v582 = vunpack.c.l.b16 %v338
      %v583 = vunpack.c.l.b16 %v348
      %v584 = vunpack.c.l.b16 %v362
      %v585 = vunpack.c.l.b16 %v372
      %v586 = vunpack.c.l.b16 %v386
      %v587 = vunpack.c.l.b16 %v396
      %v588 = vpack.c.b16 %v573, %v572
      %v589 = vpack.c.b16 %v575, %v574
      %v590 = vpack.c.b16 %v577, %v576
      %v591 = vpack.c.b16 %v579, %v578
      %v592 = vpack.c.b16 %v581, %v580
      %v593 = vpack.c.b16 %v583, %v582
      %v594 = vpack.c.b16 %v585, %v584
      %v595 = vpack.c.b16 %v587, %v586
      %596 = vrot.lane.b32.xlu0 %v588, 32
      %v597 = vpop.permute.xlu0 %596
      %598 = vrot.lane.b32.xlu0 %v589, 32
      %v599 = vpop.permute.xlu0 %598
      %600 = vrot.lane.b32.xlu0 %v590, 32
      %v601 = vpop.permute.xlu0 %600
      %602 = vrot.lane.b32.xlu0 %v591, 32
      %v603 = vpop.permute.xlu0 %602
      %604 = vrot.lane.b32.xlu0 %v592, 32
      %v605 = vpop.permute.xlu0 %604
      %606 = vrot.lane.b32.xlu0 %v593, 32
      %v607 = vpop.permute.xlu0 %606
      %608 = vrot.lane.b32.xlu0 %v594, 32
      %v609 = vpop.permute.xlu0 %608
      %610 = vrot.lane.b32.xlu0 %v595, 32
      %v611 = vpop.permute.xlu0 %610
      %v612 = vunpack.c.l.b16 %v427
      %v613 = vunpack.c.l.b16 %v430
      %v614 = vunpack.c.l.b16 %v434
      %v615 = vunpack.c.l.b16 %v437
      %v616 = vunpack.c.l.b16 %v441
      %v617 = vunpack.c.l.b16 %v444
      %v618 = vunpack.c.l.b16 %v448
      %v619 = vunpack.c.l.b16 %v451
      %v620 = vunpack.c.l.b16 %v455
      %v621 = vunpack.c.l.b16 %v458
      %v622 = vunpack.c.l.b16 %v462
      %v623 = vunpack.c.l.b16 %v465
      %v624 = vunpack.c.l.b16 %v469
      %v625 = vunpack.c.l.b16 %v472
      %v626 = vunpack.c.l.b16 %v476
      %v627 = vunpack.c.l.b16 %v479
      %v628 = vpack.c.b16 %v613, %v612
      %v629 = vpack.c.b16 %v615, %v614
      %v630 = vpack.c.b16 %v617, %v616
      %v631 = vpack.c.b16 %v619, %v618
      %v632 = vpack.c.b16 %v621, %v620
      %v633 = vpack.c.b16 %v623, %v622
      %v634 = vpack.c.b16 %v625, %v624
      %v635 = vpack.c.b16 %v627, %v626
      %636 = vrot.lane.b32.xlu0 %v628, 64
      %v637 = vpop.permute.xlu0 %636
      %638 = vrot.lane.b32.xlu0 %v629, 64
      %v639 = vpop.permute.xlu0 %638
      %640 = vrot.lane.b32.xlu0 %v630, 64
      %v641 = vpop.permute.xlu0 %640
      %642 = vrot.lane.b32.xlu0 %v631, 64
      %v643 = vpop.permute.xlu0 %642
      %644 = vrot.lane.b32.xlu0 %v632, 64
      %v645 = vpop.permute.xlu0 %644
      %646 = vrot.lane.b32.xlu0 %v633, 64
      %v647 = vpop.permute.xlu0 %646
      %648 = vrot.lane.b32.xlu0 %v634, 64
      %v649 = vpop.permute.xlu0 %648
      %650 = vrot.lane.b32.xlu0 %v635, 64
      %v651 = vpop.permute.xlu0 %650
      %v652 = vunpack.c.l.b16 %v196
      %v653 = vunpack.c.l.b16 %v197
      %v654 = vpack.c.b16 %v653, %v652
      %655 = vrot.lane.b32.xlu0 %v565, 96
      %v656 = vpop.permute.xlu0 %655
      %657 = vrot.lane.b32.xlu0 %v566, 96
      %v658 = vpop.permute.xlu0 %657
      %659 = vrot.lane.b32.xlu0 %v567, 96
      %v660 = vpop.permute.xlu0 %659
      %661 = vrot.lane.b32.xlu0 %v568, 96
      %v662 = vpop.permute.xlu0 %661
      %663 = vrot.lane.b32.xlu0 %v569, 96
      %v664 = vpop.permute.xlu0 %663
      %665 = vrot.lane.b32.xlu0 %v570, 96
      %v666 = vpop.permute.xlu0 %665
      %667 = vrot.lane.b32.xlu0 %v571, 96
      %v668 = vpop.permute.xlu0 %667
      %669 = vrot.lane.b32.xlu0 %v654, 96
      %v670 = vpop.permute.xlu0 %669
      %v671 = vunpack.c.l.b16 %v493
      %v672 = vunpack.c.l.b16 %v503
      %v673 = vpack.c.b16 %v672, %v671
      %v674 = vunpack.c.l.b16 %v510
      %v675 = vunpack.c.l.b16 %v513
      %v676 = vpack.c.b16 %v675, %v674
      %677 = vrot.lane.b32.xlu0 %v629, 32
      %v678 = vpop.permute.xlu0 %677
      %679 = vrot.lane.b32.xlu0 %v630, 32
      %v680 = vpop.permute.xlu0 %679
      %681 = vrot.lane.b32.xlu0 %v631, 32
      %v682 = vpop.permute.xlu0 %681
      %683 = vrot.lane.b32.xlu0 %v632, 32
      %v684 = vpop.permute.xlu0 %683
      %685 = vrot.lane.b32.xlu0 %v633, 32
      %v686 = vpop.permute.xlu0 %685
      %687 = vrot.lane.b32.xlu0 %v634, 32
      %v688 = vpop.permute.xlu0 %687
      %689 = vrot.lane.b32.xlu0 %v635, 32
      %v690 = vpop.permute.xlu0 %689
      %691 = vrot.lane.b32.xlu0 %v676, 32
      %v692 = vpop.permute.xlu0 %691
      %v693 = vunpack.c.l.b16 %v199
      %v694 = vunpack.c.l.b16 %v200
      %v695 = vpack.c.b16 %v694, %v693
      %696 = vrot.lane.b32.xlu0 %v566, 64
      %v697 = vpop.permute.xlu0 %696
      %698 = vrot.lane.b32.xlu0 %v567, 64
      %v699 = vpop.permute.xlu0 %698
      %700 = vrot.lane.b32.xlu0 %v568, 64
      %v701 = vpop.permute.xlu0 %700
      %702 = vrot.lane.b32.xlu0 %v569, 64
      %v703 = vpop.permute.xlu0 %702
      %704 = vrot.lane.b32.xlu0 %v570, 64
      %v705 = vpop.permute.xlu0 %704
      %706 = vrot.lane.b32.xlu0 %v571, 64
      %v707 = vpop.permute.xlu0 %706
      %708 = vrot.lane.b32.xlu0 %v654, 64
      %v709 = vpop.permute.xlu0 %708
      %710 = vrot.lane.b32.xlu0 %v695, 64
      %v711 = vpop.permute.xlu0 %710
      %v712 = vunpack.c.l.b16 %v527
      %v713 = vunpack.c.l.b16 %v537
      %v714 = vpack.c.b16 %v713, %v712
      %715 = vrot.lane.b32.xlu0 %v590, 96
      %v716 = vpop.permute.xlu0 %715
      %717 = vrot.lane.b32.xlu0 %v591, 96
      %v718 = vpop.permute.xlu0 %717
      %719 = vrot.lane.b32.xlu0 %v592, 96
      %v720 = vpop.permute.xlu0 %719
      %721 = vrot.lane.b32.xlu0 %v593, 96
      %v722 = vpop.permute.xlu0 %721
      %723 = vrot.lane.b32.xlu0 %v594, 96
      %v724 = vpop.permute.xlu0 %723
      %725 = vrot.lane.b32.xlu0 %v595, 96
      %v726 = vpop.permute.xlu0 %725
      %727 = vrot.lane.b32.xlu0 %v673, 96
      %v728 = vpop.permute.xlu0 %727
      %729 = vrot.lane.b32.xlu0 %v714, 96
      %v730 = vpop.permute.xlu0 %729
      %v731 = vunpack.c.l.b16 %v544
      %v732 = vunpack.c.l.b16 %v547
      %v733 = vpack.c.b16 %v732, %v731
      %vm734 = vcmask 261120
      %v737 = vsel %vm734, %v564, %v597
      %v740 = vsel %vm734, %v565, %v599
      %v743 = vsel %vm734, %v566, %v601
      %v746 = vsel %vm734, %v567, %v603
      %v749 = vsel %vm734, %v568, %v605
      %v752 = vsel %vm734, %v569, %v607
      %v755 = vsel %vm734, %v570, %v609
      %v758 = vsel %vm734, %v571, %v611
      %vm759 = vcmask 523264
      %v761 = vsel %vm759, %v737, %v637
      %v763 = vsel %vm759, %v740, %v639
      %v765 = vsel %vm759, %v743, %v641
      %v767 = vsel %vm759, %v746, %v643
      %v769 = vsel %vm759, %v749, %v645
      %v771 = vsel %vm759, %v752, %v647
      %v773 = vsel %vm759, %v755, %v649
      %v775 = vsel %vm759, %v758, %v651
      %vm776 = vcmask 785408
      %v778 = vsel %vm776, %v761, %v656
      %v781 = vsel %vm776, %v763, %v658
      %v784 = vsel %vm776, %v765, %v660
      %v787 = vsel %vm776, %v767, %v662
      %v790 = vsel %vm776, %v769, %v664
      %v793 = vsel %vm776, %v771, %v666
      %v796 = vsel %vm776, %v773, %v668
      %v799 = vsel %vm776, %v775, %v670
      %v803 = vsel %vm734, %v589, %v678
      %v806 = vsel %vm734, %v590, %v680
      %v809 = vsel %vm734, %v591, %v682
      %v812 = vsel %vm734, %v592, %v684
      %v815 = vsel %vm734, %v593, %v686
      %v818 = vsel %vm734, %v594, %v688
      %v821 = vsel %vm734, %v595, %v690
      %v824 = vsel %vm734, %v673, %v692
      %v826 = vsel %vm759, %v803, %v697
      %v828 = vsel %vm759, %v806, %v699
      %v830 = vsel %vm759, %v809, %v701
      %v832 = vsel %vm759, %v812, %v703
      %v834 = vsel %vm759, %v815, %v705
      %v836 = vsel %vm759, %v818, %v707
      %v838 = vsel %vm759, %v821, %v709
      %v840 = vsel %vm759, %v824, %v711
      %v842 = vsel %vm776, %v826, %v716
      %v845 = vsel %vm776, %v828, %v718
      %v848 = vsel %vm776, %v830, %v720
      %v851 = vsel %vm776, %v832, %v722
      %v854 = vsel %vm776, %v834, %v724
      %v857 = vsel %vm776, %v836, %v726
      %v860 = vsel %vm776, %v838, %v728
      %v863 = vsel %vm776, %v840, %v730
      %v865 = vld [vmem:[%s1] sm:$0xf]
      %v866 = vld [vmem:[%s1 + $0x4] sm:$0xf]
      %v867 = vld [vmem:[%s1 + $0x8] sm:$0xf]
      %v868 = vld [vmem:[%s1 + $0xc] sm:$0xf]
      %v869 = vld [vmem:[%s1 + $0x10] sm:$0xf]
      %v870 = vld [vmem:[%s1 + $0x14] sm:$0xf]
      %v871 = vld [vmem:[%s1 + $0x18] sm:$0xf]
      %v872 = vld [vmem:[%s1 + $0x1c] sm:$0xf]
      %v873 = vld [vmem:[%s1 + $0x20] sm:$0xf]
      %v874 = vld [vmem:[%s1 + $0x24] sm:$0xf]
      %v875 = vld [vmem:[%s1 + $0x28] sm:$0xf]
      %v876 = vld [vmem:[%s1 + $0x2c] sm:$0xf]
      %v877 = vld [vmem:[%s1 + $0x30] sm:$0xf]
      %v878 = vld [vmem:[%s1 + $0x34] sm:$0xf]
      %v879 = vld [vmem:[%s1 + $0x38] sm:$0xf]
      %v880 = vld [vmem:[%s1 + $0x3c] sm:$0xf]
      %v881 = vld [vmem:[%s1 + $0x40] sm:$0xf]
      %v882 = vld [vmem:[%s1 + $0x44] sm:$0xf]
      %v883 = vld [vmem:[%s1 + $0x48] sm:$0xf]
      %v884 = vld [vmem:[%s1 + $0x4c] sm:$0xf]
      %v885 = vld [vmem:[%s1 + $0x50] sm:$0xf]
      %v886 = vld [vmem:[%s1 + $0x54] sm:$0xf]
      %v887 = vld [vmem:[%s1 + $0x58] sm:$0xf]
      %v888 = vld [vmem:[%s1 + $0x5c] sm:$0xf]
      %v889 = vld [vmem:[%s1 + $0x60] sm:$0xf]
      %v890 = vld [vmem:[%s1 + $0x64] sm:$0xf]
      %v891 = vld [vmem:[%s1 + $0x68] sm:$0xf]
      %v892 = vld [vmem:[%s1 + $0x6c] sm:$0xf]
      %v893 = vld [vmem:[%s1 + $0x70] sm:$0xf]
      %v894 = vld [vmem:[%s1 + $0x74] sm:$0xf]
      %v895 = vld [vmem:[%s1 + $0x78] sm:$0xf]
      %v896 = vld [vmem:[%s1 + $0x7c] sm:$0xf]
      %v897 = vld [vmem:[%s1 + $0x80] sm:$0xf]
      %v898 = vld [vmem:[%s1 + $0x84] sm:$0xf]
      %v899 = vld [vmem:[%s1 + $0x88] sm:$0xf]
      %v900 = vld [vmem:[%s1 + $0x8c] sm:$0xf]
      %v901 = vld [vmem:[%s2] sm:$0x1]
      %v903 = vlaneseq
      %v904 = vshrl.u32 %v903, 7
      %v905 = vsub.s32 0, %v904
      %v906 = vrot.slane %v901, %v905
      %v944 = vunpack.c.l.b16 %v865
      %v945 = vunpack.c.l.b16 %v866
      %v946 = vunpack.c.l.b16 %v867
      %v947 = vunpack.c.l.b16 %v868
      %v948 = vunpack.c.l.b16 %v869
      %v949 = vunpack.c.l.b16 %v870
      %v950 = vunpack.c.l.b16 %v871
      %v951 = vunpack.c.l.b16 %v872
      %v952 = vunpack.c.l.b16 %v873
      %v953 = vunpack.c.l.b16 %v874
      %v954 = vunpack.c.l.b16 %v875
      %v955 = vunpack.c.l.b16 %v876
      %v956 = vunpack.c.l.b16 %v877
      %v957 = vunpack.c.l.b16 %v878
      %v958 = vunpack.c.l.b16 %v879
      %v959 = vunpack.c.l.b16 %v880
      %v960 = vunpack.c.l.b16 %v881
      %v961 = vunpack.c.l.b16 %v882
      %v962 = vunpack.c.l.b16 %v883
      %v963 = vunpack.c.l.b16 %v884
      %v964 = vunpack.c.l.b16 %v885
      %v965 = vunpack.c.l.b16 %v886
      %v966 = vunpack.c.l.b16 %v887
      %v967 = vunpack.c.l.b16 %v888
      %v968 = vunpack.c.l.b16 %v889
      %v969 = vunpack.c.l.b16 %v890
      %v970 = vunpack.c.l.b16 %v891
      %v971 = vunpack.c.l.b16 %v892
      %v972 = vunpack.c.l.b16 %v893
      %v973 = vunpack.c.l.b16 %v894
      %v974 = vunpack.c.l.b16 %v895
      %v975 = vunpack.c.l.b16 %v896
      %v976 = vunpack.c.l.b16 %v897
      %v977 = vunpack.c.l.b16 %v898
      %v978 = vunpack.c.l.b16 %v899
      %v979 = vunpack.c.l.b16 %v900
      %v980 = vpack.c.b16 %v945, %v944
      %v981 = vpack.c.b16 %v947, %v946
      %v982 = vpack.c.b16 %v949, %v948
      %v983 = vpack.c.b16 %v951, %v950
      %v984 = vpack.c.b16 %v953, %v952
      %v985 = vpack.c.b16 %v955, %v954
      %v986 = vpack.c.b16 %v957, %v956
      %v987 = vpack.c.b16 %v959, %v958
      %v988 = vpack.c.b16 %v961, %v960
      %v989 = vpack.c.b16 %v963, %v962
      %v990 = vpack.c.b16 %v965, %v964
      %v991 = vpack.c.b16 %v967, %v966
      %v992 = vpack.c.b16 %v969, %v968
      %v993 = vpack.c.b16 %v971, %v970
      %v994 = vpack.c.b16 %v973, %v972
      %v995 = vpack.c.b16 %v975, %v974
      %v996 = vpack.c.b16 %v977, %v976
      %v997 = vpack.c.b16 %v979, %v978
      %v1017 = vsel %vm734, %v630, 0
      %v1020 = vsel %vm734, %v631, 0
      %v1023 = vsel %vm734, %v632, 0
      %v1026 = vsel %vm734, %v633, 0
      %v1029 = vsel %vm734, %v634, 0
      %v1032 = vsel %vm734, %v635, 0
      %v1035 = vsel %vm734, %v676, 0
      %v1038 = vsel %vm734, %v733, 0
      %1040 = vmatprep.subr.bf16.mxu0 0
      %1041 = vmatpush1.bf16.msra.mxu0 %v980
      %1042 = vmatprep.subr.bf16.mxu0 0
      %1043 = vmatpush1.bf16.msra.mxu0 %v981
      %1044 = vmatprep.subr.bf16.mxu0 0
      %1045 = vmatpush1.bf16.msra.mxu0 %v982
      %1046 = vmatprep.subr.bf16.mxu0 0
      %1047 = vmatpush1.bf16.msra.mxu0 %v983
      %1048 = vmatprep.subr.bf16.mxu0 0
      %1049 = vmatpush1.bf16.msra.mxu0 %v984
      %1050 = vmatprep.subr.bf16.mxu0 0
      %1051 = vmatpush1.bf16.msra.mxu0 %v985
      %1052 = vmatprep.subr.bf16.mxu0 0
      %1053 = vmatpush1.bf16.msra.mxu0 %v986
      %1054 = vmatprep.subr.bf16.mxu0 0
      %1055 = vmatpush1.bf16.msra.mxu0 %v987
      %1056 = vmatprep.subr.bf16.mxu0 0
      %1057 = vmatpush1.bf16.msra.mxu0 %v988
      %1058 = vmatprep.subr.bf16.mxu0 0
      %1059 = vmatpush1.bf16.msra.mxu0 %v989
      %1060 = vmatprep.subr.bf16.mxu0 0
      %1061 = vmatpush1.bf16.msra.mxu0 %v990
      %1062 = vmatprep.subr.bf16.mxu0 0
      %1063 = vmatpush1.bf16.msra.mxu0 %v991
      %1064 = vmatprep.subr.bf16.mxu0 0
      %1065 = vmatpush1.bf16.msra.mxu0 %v992
      %1066 = vmatprep.subr.bf16.mxu0 0
      %1067 = vmatpush1.bf16.msra.mxu0 %v993
      %1068 = vmatprep.subr.bf16.mxu0 0
      %1069 = vmatpush1.bf16.msra.mxu0 %v994
      %1070 = vmatprep.subr.bf16.mxu0 0
      %1071 = vmatpush1.bf16.msra.mxu0 %v995
      %1072 = vmatprep.mubr.bf16.mxu0 %v842
      %1073 = vmatmul.mubr.bf16.gmra.mrb[0].mxu0 %v778
      %v1074 = vpop.f32.mrb[0].mxu0
      %v1075 = vadd.f32 %v906, %v1074
      %v1076 = vpop.f32.mrb[0].mxu0
      %v1077 = vpop.f32.mrb[0].mxu0
      %v1078 = vadd.f32 %v906, %v1077
      %v1079 = vpop.f32.mrb[0].mxu0
      %1080 = vmatprep.mubr.bf16.mxu0 %v845
      %1081 = vmatmul.mubr.bf16.gmra.mrb[0].mxu0 %v781
      %v1082 = vpop.f32.mrb[0].mxu0
      %v1083 = vadd.f32 %v906, %v1082
      %v1084 = vpop.f32.mrb[0].mxu0
      %v1085 = vpop.f32.mrb[0].mxu0
      %v1086 = vadd.f32 %v906, %v1085
      %v1087 = vpop.f32.mrb[0].mxu0
      %1088 = vmatprep.mubr.bf16.mxu0 %v848
      %1089 = vmatmul.mubr.bf16.gmra.mrb[0].mxu0 %v784
      %v1090 = vpop.f32.mrb[0].mxu0
      %v1091 = vadd.f32 %v906, %v1090
      %v1092 = vpop.f32.mrb[0].mxu0
      %v1093 = vpop.f32.mrb[0].mxu0
      %v1094 = vadd.f32 %v906, %v1093
      %v1095 = vpop.f32.mrb[0].mxu0
      %1096 = vmatprep.mubr.bf16.mxu0 %v851
      %1097 = vmatmul.mubr.bf16.gmra.mrb[0].mxu0 %v787
      %v1098 = vpop.f32.mrb[0].mxu0
      %v1099 = vadd.f32 %v906, %v1098
      %v1100 = vpop.f32.mrb[0].mxu0
      %v1101 = vpop.f32.mrb[0].mxu0
      %v1102 = vadd.f32 %v906, %v1101
      %v1103 = vpop.f32.mrb[0].mxu0
      %1104 = vmatprep.mubr.bf16.mxu0 %v854
      %1105 = vmatmul.mubr.bf16.gmra.mrb[0].mxu0 %v790
      %v1106 = vpop.f32.mrb[0].mxu0
      %v1107 = vadd.f32 %v906, %v1106
      %v1108 = vpop.f32.mrb[0].mxu0
      %v1109 = vpop.f32.mrb[0].mxu0
      %v1110 = vadd.f32 %v906, %v1109
      %v1111 = vpop.f32.mrb[0].mxu0
      %1112 = vmatprep.mubr.bf16.mxu0 %v857
      %1113 = vmatmul.mubr.bf16.gmra.mrb[0].mxu0 %v793
      %v1114 = vpop.f32.mrb[0].mxu0
      %v1115 = vadd.f32 %v906, %v1114
      %v1116 = vpop.f32.mrb[0].mxu0
      %v1117 = vpop.f32.mrb[0].mxu0
      %v1118 = vadd.f32 %v906, %v1117
      %v1119 = vpop.f32.mrb[0].mxu0
      %1120 = vmatprep.mubr.bf16.mxu0 %v860
      %1121 = vmatmul.mubr.bf16.gmra.mrb[0].mxu0 %v796
      %v1122 = vpop.f32.mrb[0].mxu0
      %v1123 = vadd.f32 %v906, %v1122
      %v1124 = vpop.f32.mrb[0].mxu0
      %v1125 = vpop.f32.mrb[0].mxu0
      %v1126 = vadd.f32 %v906, %v1125
      %v1127 = vpop.f32.mrb[0].mxu0
      %1128 = vmatprep.mubr.bf16.mxu0 %v863
      %1129 = vmatmul.mubr.bf16.gmra.mrb[0].mxu0 %v799
      %v1130 = vpop.f32.mrb[0].mxu0
      %v1131 = vadd.f32 %v906, %v1130
      %v1132 = vpop.f32.mrb[0].mxu0
      %v1133 = vpop.f32.mrb[0].mxu0
      %v1134 = vadd.f32 %v906, %v1133
      %v1135 = vpop.f32.mrb[0].mxu0
      %1136 = vdwg.mxu0
      %1137 = vmatprep.subr.bf16.mxu0 0
      %1138 = vmatpush1.bf16.msra.mxu0 %v996
      %1139 = vmatprep.subr.bf16.mxu0 0
      %1140 = vmatpush1.bf16.msra.mxu0 %v997
      %1141 = vmatprep.subr.bf16.mxu0 0
      %1142 = vmatpush1.bf16.msra.mxu0 0
      %1143 = vmatprep.subr.bf16.mxu0 0
      %1144 = vmatpush1.bf16.msra.mxu0 0
      %1145 = vmatprep.subr.bf16.mxu0 0
      %1146 = vmatpush1.bf16.msra.mxu0 0
      %1147 = vmatprep.subr.bf16.mxu0 0
      %1148 = vmatpush1.bf16.msra.mxu0 0
      %1149 = vmatprep.subr.bf16.mxu0 0
      %1150 = vmatpush1.bf16.msra.mxu0 0
      %1151 = vmatprep.subr.bf16.mxu0 0
      %1152 = vmatpush1.bf16.msra.mxu0 0
      %1153 = vmatprep.subr.bf16.mxu0 0
      %1154 = vmatpush1.bf16.msra.mxu0 0
      %1155 = vmatprep.subr.bf16.mxu0 0
      %1156 = vmatpush1.bf16.msra.mxu0 0
      %1157 = vmatprep.subr.bf16.mxu0 0
      %1158 = vmatpush1.bf16.msra.mxu0 0
      %1159 = vmatprep.subr.bf16.mxu0 0
      %1160 = vmatpush1.bf16.msra.mxu0 0
      %1161 = vmatprep.subr.bf16.mxu0 0
      %1162 = vmatpush1.bf16.msra.mxu0 0
      %1163 = vmatprep.subr.bf16.mxu0 0
      %1164 = vmatpush1.bf16.msra.mxu0 0
      %1165 = vmatprep.subr.bf16.mxu0 0
      %1166 = vmatpush1.bf16.msra.mxu0 0
      %1167 = vmatprep.subr.bf16.mxu0 0
      %1168 = vmatpush1.bf16.msra.mxu0 0
      %1169 = vmatprep.mubr.bf16.mxu0 0
      %1170 = vmatmul.mubr.bf16.gmra.mrb[0].mxu0 %v1017
      %v1171 = vpop.f32.mrb[0].mxu0
      %v1172 = vadd.f32 %v1075, %v1171
      %v1173 = vpop.f32.mrb[0].mxu0
      %v1174 = vpop.f32.mrb[0].mxu0
      %v1175 = vadd.f32 %v1078, %v1174
      %v1176 = vpop.f32.mrb[0].mxu0
      %1177 = vmatprep.mubr.bf16.mxu0 0
      %1178 = vmatmul.mubr.bf16.gmra.mrb[0].mxu0 %v1020
      %v1179 = vpop.f32.mrb[0].mxu0
      %v1180 = vadd.f32 %v1083, %v1179
      %v1181 = vpop.f32.mrb[0].mxu0
      %v1182 = vpop.f32.mrb[0].mxu0
      %v1183 = vadd.f32 %v1086, %v1182
      %v1184 = vpop.f32.mrb[0].mxu0
      %1185 = vmatprep.mubr.bf16.mxu0 0
      %1186 = vmatmul.mubr.bf16.gmra.mrb[0].mxu0 %v1023
      %v1187 = vpop.f32.mrb[0].mxu0
      %v1188 = vadd.f32 %v1091, %v1187
      %v1189 = vpop.f32.mrb[0].mxu0
      %v1190 = vpop.f32.mrb[0].mxu0
      %v1191 = vadd.f32 %v1094, %v1190
      %v1192 = vpop.f32.mrb[0].mxu0
      %1193 = vmatprep.mubr.bf16.mxu0 0
      %1194 = vmatmul.mubr.bf16.gmra.mrb[0].mxu0 %v1026
      %v1195 = vpop.f32.mrb[0].mxu0
      %v1196 = vadd.f32 %v1099, %v1195
      %v1197 = vpop.f32.mrb[0].mxu0
      %v1198 = vpop.f32.mrb[0].mxu0
      %v1199 = vadd.f32 %v1102, %v1198
      %v1200 = vpop.f32.mrb[0].mxu0
      %1201 = vmatprep.mubr.bf16.mxu0 0
      %1202 = vmatmul.mubr.bf16.gmra.mrb[0].mxu0 %v1029
      %v1203 = vpop.f32.mrb[0].mxu0
      %v1204 = vadd.f32 %v1107, %v1203
      %v1205 = vpop.f32.mrb[0].mxu0
      %v1206 = vpop.f32.mrb[0].mxu0
      %v1207 = vadd.f32 %v1110, %v1206
      %v1208 = vpop.f32.mrb[0].mxu0
      %1209 = vmatprep.mubr.bf16.mxu0 0
      %1210 = vmatmul.mubr.bf16.gmra.mrb[0].mxu0 %v1032
      %v1211 = vpop.f32.mrb[0].mxu0
      %v1212 = vadd.f32 %v1115, %v1211
      %v1213 = vpop.f32.mrb[0].mxu0
      %v1214 = vpop.f32.mrb[0].mxu0
      %v1215 = vadd.f32 %v1118, %v1214
      %v1216 = vpop.f32.mrb[0].mxu0
      %1217 = vmatprep.mubr.bf16.mxu0 0
      %1218 = vmatmul.mubr.bf16.gmra.mrb[0].mxu0 %v1035
      %v1219 = vpop.f32.mrb[0].mxu0
      %v1220 = vadd.f32 %v1123, %v1219
      %v1221 = vpop.f32.mrb[0].mxu0
      %v1222 = vpop.f32.mrb[0].mxu0
      %v1223 = vadd.f32 %v1126, %v1222
      %v1224 = vpop.f32.mrb[0].mxu0
      %1225 = vmatprep.mubr.bf16.mxu0 0
      %1226 = vmatmul.mubr.bf16.gmra.mrb[0].mxu0 %v1038
      %v1227 = vpop.f32.mrb[0].mxu0
      %v1228 = vadd.f32 %v1131, %v1227
      %v1229 = vpop.f32.mrb[0].mxu0
      %v1230 = vpop.f32.mrb[0].mxu0
      %v1231 = vadd.f32 %v1134, %v1230
      %v1232 = vpop.f32.mrb[0].mxu0
      %1233 = vdwg.mxu0
      %v1234 = vpack.c.bf16 %v1175, %v1172
      %v1235 = vpack.c.bf16 %v1183, %v1180
      %v1236 = vpack.c.bf16 %v1191, %v1188
      %v1237 = vpack.c.bf16 %v1199, %v1196
      %v1238 = vpack.c.bf16 %v1207, %v1204
      %v1239 = vpack.c.bf16 %v1215, %v1212
      %v1240 = vpack.c.bf16 %v1223, %v1220
      %v1241 = vpack.c.bf16 %v1231, %v1228
      %v1250 = vunpack.c.l.b16 %v1234
      %v1251 = vunpack.c.h.b16 %v1234
      %v1252 = vunpack.c.l.b16 %v1235
      %v1253 = vunpack.c.h.b16 %v1235
      %v1254 = vunpack.c.l.b16 %v1236
      %v1255 = vunpack.c.h.b16 %v1236
      %v1256 = vunpack.c.l.b16 %v1237
      %v1257 = vunpack.c.h.b16 %v1237
      %v1258 = vunpack.c.l.b16 %v1238
      %v1259 = vunpack.c.h.b16 %v1238
      %v1260 = vunpack.c.l.b16 %v1239
      %v1261 = vunpack.c.h.b16 %v1239
      %v1262 = vunpack.c.l.b16 %v1240
      %v1263 = vunpack.c.h.b16 %v1240
      %v1264 = vunpack.c.l.b16 %v1241
      %v1265 = vunpack.c.h.b16 %v1241
      %v1266 = vpack.c.b16 %v1250, %v1250
      %v1267 = vpack.c.b16 %v1251, %v1251
      %v1268 = vpack.c.b16 %v1252, %v1252
      %v1269 = vpack.c.b16 %v1253, %v1253
      %v1270 = vpack.c.b16 %v1254, %v1254
      %v1271 = vpack.c.b16 %v1255, %v1255
      %v1272 = vpack.c.b16 %v1256, %v1256
      %v1273 = vpack.c.b16 %v1257, %v1257
      %v1274 = vpack.c.b16 %v1258, %v1258
      %v1275 = vpack.c.b16 %v1259, %v1259
      %v1276 = vpack.c.b16 %v1260, %v1260
      %v1277 = vpack.c.b16 %v1261, %v1261
      %v1278 = vpack.c.b16 %v1262, %v1262
      %v1279 = vpack.c.b16 %v1263, %v1263
      %v1280 = vpack.c.b16 %v1264, %v1264
      %v1281 = vpack.c.b16 %v1265, %v1265
      %1298 = vst [vmem:[%s170] sm:$0xf] %v1266
      %1299 = vst [vmem:[%s170 + $0x4] sm:$0xf] %v1267
      %1300 = vst [vmem:[%s170 + $0x8] sm:$0xf] %v1268
      %1301 = vst [vmem:[%s170 + $0xc] sm:$0xf] %v1269
      %1302 = vst [vmem:[%s170 + $0x10] sm:$0xf] %v1270
      %1303 = vst [vmem:[%s170 + $0x14] sm:$0xf] %v1271
      %1304 = vst [vmem:[%s170 + $0x18] sm:$0xf] %v1272
      %1305 = vst [vmem:[%s170 + $0x1c] sm:$0xf] %v1273
      %1306 = vst [vmem:[%s170 + $0x20] sm:$0xf] %v1274
      %1307 = vst [vmem:[%s170 + $0x24] sm:$0xf] %v1275
      %1308 = vst [vmem:[%s170 + $0x28] sm:$0xf] %v1276
      %1309 = vst [vmem:[%s170 + $0x2c] sm:$0xf] %v1277
      %1310 = vst [vmem:[%s170 + $0x30] sm:$0xf] %v1278
      %1311 = vst [vmem:[%s170 + $0x34] sm:$0xf] %v1279
      %1312 = vst [vmem:[%s170 + $0x38] sm:$0xf] %v1280
      %1313 = vst [vmem:[%s170 + $0x3c] sm:$0xf] %v1281
      %p1314 = scmp.lt.s32.totalorder %s14, 3
      %s1315 = scalar_select %p1314, %s14, 3
      %s1316 = smul.addr %s1315, 16
      %s1317 = smul.addr %s1316, 4
      %s1318 = scalar_lea.vmem %s3, %s1317
      // Predicated region
      $region33: #{upsample_forward.1} parent=31 // pred_check
        %p1319 = pneg %p100
      $region34: #{upsample_forward.1} parent=31 // pred_check_branch
        %1321 = sbr.rel (%p1319) target = $region36
      $region35: #{upsample_forward.1} parent=31 // pred_region
        _
      $region36: #{upsample_forward.1} parent=31 // pred_fallthru
        _
    $region32: #{upsample_forward.1} parent=5 // pred_fallthru
      _
    %p1322 = scmp.le.s32.totalorder 2, %s9
    // Predicated region
    $region37: #{upsample_forward.1} parent=5 // pred_check
      %p1323 = pneg %p1322
    $region38: #{upsample_forward.1} parent=5 // pred_check_branch
      %1325 = sbr.rel (%p1323) target = $region40
    $region39: #{upsample_forward.1} parent=5 // pred_region
      %s1326 = ssub.s32 %s9, 2
      // Predicated region
      $region41: #{upsample_forward.1} parent=39 // pred_check
        %p1327 = pneg %p106
      $region42: #{upsample_forward.1} parent=39 // pred_check_branch
        %1329 = sbr.rel (%p1327) target = $region44
      $region43: #{upsample_forward.1} parent=39 // pred_region
        %p1330 = scmp.lt.s32.totalorder %s15, 3
        %s1331 = scalar_select %p1330, %s15, 3
        %s1332 = smul.addr %s1331, 16
        %s1333 = smul.addr %s1332, 4
        %s1334 = scalar_lea.vmem %s3, %s1333
      $region44: #{upsample_forward.1} parent=39 // pred_fallthru
        _
    $region40: #{upsample_forward.1} parent=5 // pred_fallthru
      _
  $region6: #{upsample_forward.1} parent=0 // loop_footer
    %s13 = sadd.s32 1, %s9
  $region7: #{upsample_forward.1} parent=0 // loop_footer_branch
    %8 = sbr.rel target = $region3
  $region8: #{upsample_forward.1} parent=0 // loop_exit
    _

</llo_original>
